<compile_context>
chip_gen: v7x
topology: tpu7x:2x2x1
jax: 0.10.0
libtpu: 0.0.40
codegen_flags: <defaults>
</compile_context>

<pallas_src>
import jax
import jax.numpy as jnp
from jax.experimental import pallas as pl
from jax.experimental.pallas import tpu as pltpu

_NEG = -1e30          # finite "masked" additive bias (avoids -inf -> NaN)
_DEN_EPS = 1e-9       # guards 0/0 for fully-masked / padding segments


def _third_attention_kernel(xim_ref, bias_ref, wstk_ref, bstk_ref, sseg_ref,
                            w1_ref, b1_ref, w2_ref, b2_ref, out_ref):
    # xim_ref : [K*E, bb*L] bf16 im2col activations for this batch block
    # bias_ref: [1, bb*L]   f32  additive mask bias (0 keep / -1e30 drop)
    # wstk_ref: [2E, K*E]   bf16 stacked {conv ; attend∘conv} weights
    # bstk_ref: [2E, 1]     f32  stacked biases
    # sseg_ref: [bb*L, bb]  f32  block-diagonal segment-sum matrix
    # out_ref : [D, bb]
    two_e = wstk_ref.shape[0]
    e = two_e // 2

    # --- fused conv1 + attend: one deep MXU contraction --------------------
    res = jnp.dot(wstk_ref[...], xim_ref[...],
                  preferred_element_type=jnp.float32) + bstk_ref[...]
    o = res[:e, :]                                           # [E, bb*L]
    att = res[e:, :] + bias_ref[...]                         # [E, bb*L] masked

    # TODO(synk): Dropout(conv_dropout)/Dropout(dropout) are identity (eval).

    # --- vectorized masked softmax + attention pooling ----------------------
    # Block-wide per-row max is a valid constant per (E-row, segment); logits
    # here are O(1) so no per-segment underflow (eps on the denominator
    # guards fully-masked segments).
    m = jnp.max(att, axis=-1, keepdims=True)                 # [E, 1]
    p = jnp.exp(att - m)                                     # masked lanes -> 0

    stacked = jnp.concatenate([p, o * p], axis=0)            # [2E, bb*L]
    sums = jnp.dot(stacked, sseg_ref[...],
                   preferred_element_type=jnp.float32)       # [2E, bb]
    den = sums[:e, :]                                        # [E, bb]
    num = sums[e:, :]                                        # [E, bb]
    pooled = num * pl.reciprocal(den + _DEN_EPS, approx=True)  # [E, bb]

    # --- head: Linear(E,32) -> ReLU -> (BatchNorm folded into output W) -----
    h = jnp.dot(w1_ref[...], pooled,
                preferred_element_type=jnp.float32) + b1_ref[...]   # [H, bb]
    h = jnp.maximum(h, 0.0)

    # --- output: Linear(32, output_dim) with BN folded in -------------------
    logits = jnp.dot(w2_ref[...], h,
                     preferred_element_type=jnp.float32) + b2_ref[...]
    out_ref[...] = logits.astype(out_ref.dtype)              # [D, bb]


def _choose_batch_block(B, L):
    """Batch elements folded into the lane dim per grid step."""
    del L  # VMEM is never the constraint at these shapes; pick for TC count.
    kind = ""
    try:
        kind = jax.devices()[0].device_kind.lower()
    except Exception:
        pass
    if ("v7" in kind or "7x" in kind) and B >= 2:
        # v7x: 2 TensorCores per chip -> keep >= 2 parallel grid steps.
        return max(1, min(16, -(-B // 2)))
    # Single-TensorCore chips (v5e/v6e): one grid step amortizes the ~0.35us
    # per-step pipeline overhead and widens every matmul / the output store.
    return max(1, min(16, B))


def third_attention_forward(x, mask, params, *, bb=None):
    """x: [B, E, L] float32, mask: [B, L] bool. Returns logits [B, D] f32."""
    B, E, L = x.shape
    wconv = params["wconv"]                      # [K, E_out, E_in]
    K = wconv.shape[0]
    pad = K // 2
    H = params["w1"].shape[0]
    D = params["w2"].shape[0]

    if bb is None:
        bb = _choose_batch_block(B, L)
    G = -(-B // bb)                              # grid steps
    Bp = G * bb

    # --- weight folding (all in f32, cast once to bf16 for MXU operands) ---
    w2d = wconv.transpose(1, 0, 2).reshape(E, K * E)           # [E, K*E]
    watt = params["watt"]                                      # [E, E]
    wstk = jnp.concatenate([w2d, watt @ w2d], axis=0).astype(jnp.bfloat16)
    bconv = params["bconv"]                                    # [E, 1]
    bstk = jnp.concatenate([bconv, watt @ bconv + params["batt"]], axis=0)

    # BatchNorm1d (eval) folded into the output Linear.
    w2f = params["w2"] * params["bn_scale"][:, 0][None, :]     # [D, H]
    b2f = params["w2"] @ params["bn_shift"] + params["b2"]     # [D, 1]

    # Block-diagonal segment-sum matrix: S[b*L + l, b] = 1.
    sseg = jnp.repeat(jnp.eye(bb, dtype=jnp.float32), L, axis=0)  # [bb*L, bb]

    # --- activations --------------------------------------------------------
    xb = jnp.pad(x, ((0, Bp - B), (0, 0), (0, 0)))             # [Bp, E, L]
    mb = jnp.pad(mask, ((0, Bp - B), (0, 0)))                  # [Bp, L] bool

    # Additive mask bias in lane-packed layout: [G, 1, bb*L].
    bias_g = jnp.where(mb, 0.0, _NEG).astype(jnp.float32).reshape(G, 1, bb * L)

    # im2col built in the wrapper (cheap XLA reshapes/transposes):
    #   xim[g, k*E+e, b*L+l] = xpad[g*bb+b, e, l+k]
    # TODO(synk): for large E*L build the im2col in-kernel from K shifted
    # slices of x to avoid the K-fold HBM expansion + extra prologue HLOs.
    xpad = jnp.pad(xb, ((0, 0), (0, 0), (pad, pad)))           # [Bp, E, L+2p]
    shifts = jnp.stack([xpad[:, :, k:k + L] for k in range(K)], axis=1)
    xim = (shifts.reshape(G, bb, K * E, L)
                 .transpose(0, 2, 1, 3)
                 .reshape(G, K * E, bb * L)
                 .astype(jnp.bfloat16))

    weight_spec = lambda shape: pl.BlockSpec(shape, lambda g: (0,) * len(shape))

    inputs = (xim, bias_g, wstk, bstk, sseg,
              params["w1"], params["b1"], w2f, b2f)

    flops = (2 * (2 * E) * (K * E) * (Bp * L)          # fused conv + attend
             + 2 * (2 * E) * L * bb * Bp               # segment-sum pooling
             + 2 * Bp * (H * E + D * H))               # head
    bytes_accessed = sum(int(a.size) * a.dtype.itemsize for a in inputs)
    bytes_accessed += Bp * D * 4
    cost = pl.CostEstimate(flops=flops, transcendentals=Bp * E * L,
                           bytes_accessed=bytes_accessed)

    # TODO(synk): emit [G, bb, D] directly from the kernel (drop the epilogue
    # transpose) once the tiny in-kernel transpose is verified on all gens.
    out = pl.pallas_call(
        _third_attention_kernel,
        out_shape=jax.ShapeDtypeStruct((G, D, bb), jnp.float32),
        grid=(G,),
        in_specs=[
            pl.BlockSpec((None, K * E, bb * L), lambda g: (g, 0, 0)),  # xim
            pl.BlockSpec((None, 1, bb * L), lambda g: (g, 0, 0)),      # bias
            weight_spec((2 * E, K * E)),                               # W stk
            weight_spec((2 * E, 1)),                                   # b stk
            weight_spec((bb * L, bb)),                                 # seg sum
            weight_spec((H, E)),                                       # linear W
            weight_spec((H, 1)),                                       # linear b
            weight_spec((D, H)),                                       # out W (BN folded)
            weight_spec((D, 1)),                                       # out b (BN folded)
        ],
        out_specs=pl.BlockSpec((None, D, bb), lambda g: (g, 0, 0)),
        compiler_params=pltpu.CompilerParams(
            dimension_semantics=("parallel",)),
        cost_estimate=cost,
    )(*inputs)

    return out.transpose(0, 2, 1).reshape(Bp, D)[:B]                 # [B, D]


def third_attention_reference(x, mask, params):
    """Pure-JAX float32 reference (faithful to the PyTorch module)."""
    B, E, L = x.shape
    wconv = params["wconv"]
    K = wconv.shape[0]
    pad = K // 2
    xpad = jnp.pad(x, ((0, 0), (0, 0), (pad, pad)))
    o = jnp.zeros((B, E, L), jnp.float32)
    for k in range(K):
        o = o + jnp.einsum("oc,bcl->bol", wconv[k], xpad[:, :, k:k + L])
    o = o + params["bconv"][None]
    att = jnp.einsum("oc,bcl->bol", params["watt"], o) + params["batt"][None]
    att = jnp.where(mask[:, None, :], att, -jnp.inf)
    p = jax.nn.softmax(att, axis=-1)
    pooled = jnp.sum(o * p, axis=-1)                            # [B, E]
    h = pooled @ params["w1"].T + params["b1"][:, 0]
    h = jnp.maximum(h, 0.0)
    h = h * params["bn_scale"][:, 0] + params["bn_shift"][:, 0]
    return h @ params["w2"].T + params["b2"][:, 0]


def make_params(key, E, K, H, D):
    ks = jax.random.split(key, 8)
    eps = 1e-5
    return {
        "wconv": 0.05 * jax.random.normal(ks[0], (K, E, E), jnp.float32),
        "bconv": 0.05 * jax.random.normal(ks[1], (E, 1), jnp.float32),
        "watt": 0.05 * jax.random.normal(ks[2], (E, E), jnp.float32),
        "batt": 0.05 * jax.random.normal(ks[3], (E, 1), jnp.float32),
        "w1": 0.10 * jax.random.normal(ks[4], (H, E), jnp.float32),
        "b1": 0.10 * jax.random.normal(ks[5], (H, 1), jnp.float32),
        # BatchNorm1d eval: gamma=1, beta=0, running_mean=0, running_var=1
        "bn_scale": jnp.full((H, 1), 1.0 / jnp.sqrt(1.0 + eps), jnp.float32),
        "bn_shift": jnp.zeros((H, 1), jnp.float32),
        "w2": 0.10 * jax.random.normal(ks[6], (D, H), jnp.float32),
        "b2": 0.10 * jax.random.normal(ks[7], (D, 1), jnp.float32),
    }


if __name__ == "__main__":
    B, E, L = 16, 32, 16         # batch, embeddings_dim, sequence_length
    K, H, D = 7, 32, 11          # kernel_size, hidden, output_dim

    key = jax.random.PRNGKey(0)
    kx, kp = jax.random.split(key)
    x = jax.random.normal(kx, (B, E, L), jnp.float32)

    # sequence_lengths / frequencies are unused by the PyTorch forward;
    # only `mask` participates.
    sequence_lengths = (jnp.arange(B, dtype=jnp.int32) % L) + 1
    mask = jnp.arange(L)[None, :] < sequence_lengths[:, None]   # [B, L] bool

    params = make_params(kp, E, K, H, D)

    out = third_attention_forward(x, mask, params)
    out = jax.block_until_ready(out)

    ref = third_attention_reference(x, mask, params)
    assert out.shape == (B, D), out.shape
    # bf16 MXU operands (f32 accumulation) + approx reciprocal => 2e-2 tol.
    assert jnp.allclose(out, ref, rtol=2e-2, atol=2e-2), (
        float(jnp.max(jnp.abs(out - ref))))

    print("KERNEL_OK")
</pallas_src>

<mosaic_0001>
module attributes {stable_mosaic.version = 11 : i64} {
  func.func @_third_attention_kernel(%arg0: i32, %arg1: memref<1x224x256xbf16, #tpu.memory_space<vmem>>, %arg2: memref<1x1x256xf32, #tpu.memory_space<vmem>>, %arg3: memref<64x224xbf16, #tpu.memory_space<vmem>>, %arg4: memref<64x1xf32, #tpu.memory_space<vmem>>, %arg5: memref<256x16xf32, #tpu.memory_space<vmem>>, %arg6: memref<32x32xf32, #tpu.memory_space<vmem>>, %arg7: memref<32x1xf32, #tpu.memory_space<vmem>>, %arg8: memref<11x32xf32, #tpu.memory_space<vmem>>, %arg9: memref<11x1xf32, #tpu.memory_space<vmem>>, %arg10: memref<1x11x16xf32, #tpu.memory_space<vmem>>) attributes {dimension_semantics = [#tpu.dimension_semantics<parallel>], iteration_bounds = array<i64: 1>, scalar_prefetch = 0 : i64, scratch_operands = 0 : i64, tpu.core_type = #tpu.core_type<tc>, window_params = [{transform_indices = @transform_0, window_bounds = array<i64: 1, 224, 256>}, {transform_indices = @transform_1, window_bounds = array<i64: 1, 1, 256>}, {pipeline_mode = #tpu.pipeline_mode<synchronous>, transform_indices = @transform_2, window_bounds = array<i64: 64, 224>}, {pipeline_mode = #tpu.pipeline_mode<synchronous>, transform_indices = @transform_3, window_bounds = array<i64: 64, 1>}, {pipeline_mode = #tpu.pipeline_mode<synchronous>, transform_indices = @transform_4, window_bounds = array<i64: 256, 16>}, {pipeline_mode = #tpu.pipeline_mode<synchronous>, transform_indices = @transform_5, window_bounds = array<i64: 32, 32>}, {pipeline_mode = #tpu.pipeline_mode<synchronous>, transform_indices = @transform_6, window_bounds = array<i64: 32, 1>}, {pipeline_mode = #tpu.pipeline_mode<synchronous>, transform_indices = @transform_7, window_bounds = array<i64: 11, 32>}, {pipeline_mode = #tpu.pipeline_mode<synchronous>, transform_indices = @transform_8, window_bounds = array<i64: 11, 1>}, {transform_indices = @transform_9, window_bounds = array<i64: 1, 11, 16>}]} {
    %c0 = arith.constant 0 : index
    %c0_0 = arith.constant 0 : index
    %0 = vector.load %arg3[%c0, %c0_0] : memref<64x224xbf16, #tpu.memory_space<vmem>>, vector<64x224xbf16>
    %c0_1 = arith.constant 0 : index
    %c0_2 = arith.constant 0 : index
    %c0_3 = arith.constant 0 : index
    %1 = vector.load %arg1[%c0_1, %c0_2, %c0_3] : memref<1x224x256xbf16, #tpu.memory_space<vmem>>, vector<1x224x256xbf16>
    %2 = vector.shape_cast %1 : vector<1x224x256xbf16> to vector<224x256xbf16>
    %cst = arith.constant dense<0.000000e+00> : vector<64x256xf32>
    %3 = tpu.matmul %0, %2, %cst {dimension_numbers = #tpu.dot_dimension_numbers<[1], [0], [0], [1], [0, 0, 1, 1], [], []>} : vector<64x224xbf16>, vector<224x256xbf16>, vector<64x256xf32> -> vector<64x256xf32>
    %c0_4 = arith.constant 0 : index
    %c0_5 = arith.constant 0 : index
    %4 = vector.load %arg4[%c0_4, %c0_5] : memref<64x1xf32, #tpu.memory_space<vmem>>, vector<64x1xf32>
    %5 = vector.broadcast %4 : vector<64x1xf32> to vector<64x256xf32>
    %6 = arith.addf %3, %5 : vector<64x256xf32>
    %7 = vector.extract_strided_slice %6 {offsets = [0, 0], sizes = [32, 256], strides = [1, 1]} : vector<64x256xf32> to vector<32x256xf32>
    %8 = vector.extract_strided_slice %6 {offsets = [32, 0], sizes = [32, 256], strides = [1, 1]} : vector<64x256xf32> to vector<32x256xf32>
    %c0_6 = arith.constant 0 : index
    %c0_7 = arith.constant 0 : index
    %c0_8 = arith.constant 0 : index
    %9 = vector.load %arg2[%c0_6, %c0_7, %c0_8] : memref<1x1x256xf32, #tpu.memory_space<vmem>>, vector<1x1x256xf32>
    %10 = vector.shape_cast %9 : vector<1x1x256xf32> to vector<1x256xf32>
    %11 = vector.broadcast %10 : vector<1x256xf32> to vector<32x256xf32>
    %12 = arith.addf %8, %11 : vector<32x256xf32>
    %cst_9 = arith.constant dense<0xFF800000> : vector<32xf32>
    %13 = vector.multi_reduction <maximumf>, %12, %cst_9 [1] : vector<32x256xf32> to vector<32xf32>
    %14 = vector.shape_cast %13 : vector<32xf32> to vector<32x1xf32>
    %15 = vector.broadcast %14 : vector<32x1xf32> to vector<32x256xf32>
    %16 = arith.subf %12, %15 : vector<32x256xf32>
    %17 = math.exp %16 : vector<32x256xf32>
    %18 = arith.mulf %7, %17 : vector<32x256xf32>
    %19 = tpu.concatenate %17, %18 in 0 : vector<32x256xf32>, vector<32x256xf32> -> vector<64x256xf32>
    %c0_10 = arith.constant 0 : index
    %c0_11 = arith.constant 0 : index
    %20 = vector.load %arg5[%c0_10, %c0_11] : memref<256x16xf32, #tpu.memory_space<vmem>>, vector<256x16xf32>
    %cst_12 = arith.constant dense<0.000000e+00> : vector<64x16xf32>
    %21 = tpu.matmul %19, %20, %cst_12 {dimension_numbers = #tpu.dot_dimension_numbers<[1], [0], [0], [1], [0, 0, 1, 1], [], []>} : vector<64x256xf32>, vector<256x16xf32>, vector<64x16xf32> -> vector<64x16xf32>
    %22 = vector.extract_strided_slice %21 {offsets = [0, 0], sizes = [32, 16], strides = [1, 1]} : vector<64x16xf32> to vector<32x16xf32>
    %23 = vector.extract_strided_slice %21 {offsets = [32, 0], sizes = [32, 16], strides = [1, 1]} : vector<64x16xf32> to vector<32x16xf32>
    %cst_13 = arith.constant 9.99999971E-10 : f32
    %24 = vector.broadcast %cst_13 : f32 to vector<32x16xf32>
    %25 = arith.addf %22, %24 : vector<32x16xf32>
    %26 = tpu.reciprocal %25 {approx = true} : vector<32x16xf32> -> vector<32x16xf32>
    %27 = arith.mulf %23, %26 : vector<32x16xf32>
    %c0_14 = arith.constant 0 : index
    %c0_15 = arith.constant 0 : index
    %28 = vector.load %arg6[%c0_14, %c0_15] : memref<32x32xf32, #tpu.memory_space<vmem>>, vector<32x32xf32>
    %cst_16 = arith.constant dense<0.000000e+00> : vector<32x16xf32>
    %29 = tpu.matmul %28, %27, %cst_16 {dimension_numbers = #tpu.dot_dimension_numbers<[1], [0], [0], [1], [0, 0, 1, 1], [], []>} : vector<32x32xf32>, vector<32x16xf32>, vector<32x16xf32> -> vector<32x16xf32>
    %c0_17 = arith.constant 0 : index
    %c0_18 = arith.constant 0 : index
    %30 = vector.load %arg7[%c0_17, %c0_18] : memref<32x1xf32, #tpu.memory_space<vmem>>, vector<32x1xf32>
    %31 = vector.broadcast %30 : vector<32x1xf32> to vector<32x16xf32>
    %32 = arith.addf %29, %31 : vector<32x16xf32>
    %cst_19 = arith.constant 0.000000e+00 : f32
    %33 = vector.broadcast %cst_19 : f32 to vector<32x16xf32>
    %34 = arith.maximumf %32, %33 : vector<32x16xf32>
    %c0_20 = arith.constant 0 : index
    %c0_21 = arith.constant 0 : index
    %35 = vector.load %arg8[%c0_20, %c0_21] : memref<11x32xf32, #tpu.memory_space<vmem>>, vector<11x32xf32>
    %cst_22 = arith.constant dense<0.000000e+00> : vector<11x16xf32>
    %36 = tpu.matmul %35, %34, %cst_22 {dimension_numbers = #tpu.dot_dimension_numbers<[1], [0], [0], [1], [0, 0, 1, 1], [], []>} : vector<11x32xf32>, vector<32x16xf32>, vector<11x16xf32> -> vector<11x16xf32>
    %c0_23 = arith.constant 0 : index
    %c0_24 = arith.constant 0 : index
    %37 = vector.load %arg9[%c0_23, %c0_24] : memref<11x1xf32, #tpu.memory_space<vmem>>, vector<11x1xf32>
    %38 = vector.broadcast %37 : vector<11x1xf32> to vector<11x16xf32>
    %39 = arith.addf %36, %38 : vector<11x16xf32>
    %c0_25 = arith.constant 0 : index
    %c0_26 = arith.constant 0 : index
    %c0_27 = arith.constant 0 : index
    %40 = vector.load %arg10[%c0_25, %c0_26, %c0_27] : memref<1x11x16xf32, #tpu.memory_space<vmem>>, vector<1x11x16xf32>
    %41 = vector.shape_cast %40 : vector<1x11x16xf32> to vector<11x16xf32>
    %42 = vector.shape_cast %39 : vector<11x16xf32> to vector<1x11x16xf32>
    tpu.vector_store %arg10[%c0_25, %c0_26, %c0_27], %42 {strides = array<i32>} : memref<1x11x16xf32, #tpu.memory_space<vmem>>, vector<1x11x16xf32>,
    return
  }
  func.func @transform_0(%arg0: i32) -> (i32, i32, i32) {
    %c0_i32 = arith.constant 0 : i32
    %c0_i32_0 = arith.constant 0 : i32
    %c0_i32_1 = arith.constant 0 : i32
    return %arg0, %c0_i32, %c0_i32_0 : i32, i32, i32
  }
  func.func @transform_1(%arg0: i32) -> (i32, i32, i32) {
    %c0_i32 = arith.constant 0 : i32
    %c0_i32_0 = arith.constant 0 : i32
    %c0_i32_1 = arith.constant 0 : i32
    return %arg0, %c0_i32, %c0_i32_0 : i32, i32, i32
  }
  func.func @transform_2(%arg0: i32) -> (i32, i32) {
    %c0_i32 = arith.constant 0 : i32
    %c0_i32_0 = arith.constant 0 : i32
    %c0_i32_1 = arith.constant 0 : i32
    return %c0_i32, %c0_i32_0 : i32, i32
  }
  func.func @transform_3(%arg0: i32) -> (i32, i32) {
    %c0_i32 = arith.constant 0 : i32
    %c0_i32_0 = arith.constant 0 : i32
    %c0_i32_1 = arith.constant 0 : i32
    return %c0_i32, %c0_i32_0 : i32, i32
  }
  func.func @transform_4(%arg0: i32) -> (i32, i32) {
    %c0_i32 = arith.constant 0 : i32
    %c0_i32_0 = arith.constant 0 : i32
    %c0_i32_1 = arith.constant 0 : i32
    return %c0_i32, %c0_i32_0 : i32, i32
  }
  func.func @transform_5(%arg0: i32) -> (i32, i32) {
    %c0_i32 = arith.constant 0 : i32
    %c0_i32_0 = arith.constant 0 : i32
    %c0_i32_1 = arith.constant 0 : i32
    return %c0_i32, %c0_i32_0 : i32, i32
  }
  func.func @transform_6(%arg0: i32) -> (i32, i32) {
    %c0_i32 = arith.constant 0 : i32
    %c0_i32_0 = arith.constant 0 : i32
    %c0_i32_1 = arith.constant 0 : i32
    return %c0_i32, %c0_i32_0 : i32, i32
  }
  func.func @transform_7(%arg0: i32) -> (i32, i32) {
    %c0_i32 = arith.constant 0 : i32
    %c0_i32_0 = arith.constant 0 : i32
    %c0_i32_1 = arith.constant 0 : i32
    return %c0_i32, %c0_i32_0 : i32, i32
  }
  func.func @transform_8(%arg0: i32) -> (i32, i32) {
    %c0_i32 = arith.constant 0 : i32
    %c0_i32_0 = arith.constant 0 : i32
    %c0_i32_1 = arith.constant 0 : i32
    return %c0_i32, %c0_i32_0 : i32, i32
  }
  func.func @transform_9(%arg0: i32) -> (i32, i32, i32) {
    %c0_i32 = arith.constant 0 : i32
    %c0_i32_0 = arith.constant 0 : i32
    %c0_i32_1 = arith.constant 0 : i32
    return %arg0, %c0_i32, %c0_i32_0 : i32, i32, i32
  }
}

</mosaic_0001>

<llo_original>
// kernel: tpu_custom_call.1
$region0: #{tpu_custom_call.1}
  #allocation0 [shape = 'u32[]', space=smem, size = 0x4, offset = 0x4, fixed_abs, tag = 'smem constant byte address 0x4 - core index']
  #allocation1 [shape = 'u32[144,128]{1,0:T(1,128)}', space=vmem, size = 0x12000, scoped, tag = 'internal scratch']
  %s0 = inlined_call_operand.vmem [shape: bf16[1,224,256], index: 0, kind: input, shape index: {}]
  %s1 = inlined_call_operand.vmem [shape: f32[1,1,256], index: 1, kind: input, shape index: {}]
  %s2 = inlined_call_operand.vmem [shape: bf16[64,224], index: 2, kind: input, shape index: {}]
  %s3 = inlined_call_operand.vmem [shape: f32[64,1], index: 3, kind: input, shape index: {}]
  %s4 = inlined_call_operand.vmem [shape: f32[256,16], index: 4, kind: input, shape index: {}]
  %s5 = inlined_call_operand.vmem [shape: f32[32,32], index: 5, kind: input, shape index: {}]
  %s6 = inlined_call_operand.vmem [shape: f32[32,1], index: 6, kind: input, shape index: {}]
  %s7 = inlined_call_operand.vmem [shape: f32[11,32], index: 7, kind: input, shape index: {}]
  %s8 = inlined_call_operand.vmem [shape: f32[11,1], index: 8, kind: input, shape index: {}]
  %s9 = inlined_call_operand.vmem [shape: f32[1,11,16], index: 9, kind: output, shape index: {}]
  %s10 = sld [smem:[#allocation0]]
  $region46: #{tpu_custom_call.1} parent=0
    _
  %s12 = ssub.s32 1, %s10
  %s13 = scalar_select 0, %s12, %s10
  // Predicated region
  $region2: #{tpu_custom_call.1} parent=0 // pred_check
    _
  $region3: #{tpu_custom_call.1} parent=0 // pred_check_branch
    %15 = sbr.rel (0) target = $region5
  $region4: #{tpu_custom_call.1} parent=0 // pred_region
    _
  $region5: #{tpu_custom_call.1} parent=0 // pred_fallthru
    _
  // Predicated region
  $region6: #{tpu_custom_call.1} parent=0 // pred_check
    _
  $region7: #{tpu_custom_call.1} parent=0 // pred_check_branch
    %17 = sbr.rel (0) target = $region9
  $region8: #{tpu_custom_call.1} parent=0 // pred_region
    _
  $region9: #{tpu_custom_call.1} parent=0 // pred_fallthru
    _
  // Predicated region
  $region10: #{tpu_custom_call.1} parent=0 // pred_check
    _
  $region11: #{tpu_custom_call.1} parent=0 // pred_check_branch
    %19 = sbr.rel (0) target = $region13
  $region12: #{tpu_custom_call.1} parent=0 // pred_region
    _
  $region13: #{tpu_custom_call.1} parent=0 // pred_fallthru
    _
  // Predicated region
  $region14: #{tpu_custom_call.1} parent=0 // pred_check
    _
  $region15: #{tpu_custom_call.1} parent=0 // pred_check_branch
    %21 = sbr.rel (0) target = $region17
  $region16: #{tpu_custom_call.1} parent=0 // pred_region
    _
  $region17: #{tpu_custom_call.1} parent=0 // pred_fallthru
    _
  // Predicated region
  $region18: #{tpu_custom_call.1} parent=0 // pred_check
    _
  $region19: #{tpu_custom_call.1} parent=0 // pred_check_branch
    %23 = sbr.rel (0) target = $region21
  $region20: #{tpu_custom_call.1} parent=0 // pred_region
    _
  $region21: #{tpu_custom_call.1} parent=0 // pred_fallthru
    _
  // Predicated region
  $region22: #{tpu_custom_call.1} parent=0 // pred_check
    _
  $region23: #{tpu_custom_call.1} parent=0 // pred_check_branch
    %25 = sbr.rel (0) target = $region25
  $region24: #{tpu_custom_call.1} parent=0 // pred_region
    _
  $region25: #{tpu_custom_call.1} parent=0 // pred_fallthru
    _
  // Predicated region
  $region26: #{tpu_custom_call.1} parent=0 // pred_check
    _
  $region27: #{tpu_custom_call.1} parent=0 // pred_check_branch
    %27 = sbr.rel (0) target = $region29
  $region28: #{tpu_custom_call.1} parent=0 // pred_region
    _
  $region29: #{tpu_custom_call.1} parent=0 // pred_fallthru
    _
  // Predicated region
  $region30: #{tpu_custom_call.1} parent=0 // pred_check
    _
  $region31: #{tpu_custom_call.1} parent=0 // pred_check_branch
    %29 = sbr.rel (0) target = $region33
  $region32: #{tpu_custom_call.1} parent=0 // pred_region
    _
  $region33: #{tpu_custom_call.1} parent=0 // pred_fallthru
    _
  // Predicated region
  $region34: #{tpu_custom_call.1} parent=0 // pred_check
    _
  $region35: #{tpu_custom_call.1} parent=0 // pred_check_branch
    %31 = sbr.rel (0) target = $region37
  $region36: #{tpu_custom_call.1} parent=0 // pred_region
    _
  $region37: #{tpu_custom_call.1} parent=0 // pred_fallthru
    _
  %v33 = vld [vmem:[%s2] sm:$0xff]
  %v34 = vld [vmem:[%s2 + $0x8] sm:$0xff]
  %v35 = vld [vmem:[%s2 + $0x10] sm:$0xff]
  %v36 = vld [vmem:[%s2 + $0x18] sm:$0xff]
  %v37 = vld [vmem:[%s2 + $0x20] sm:$0xff]
  %v38 = vld [vmem:[%s2 + $0x28] sm:$0xff]
  %v39 = vld [vmem:[%s2 + $0x30] sm:$0xff]
  %v40 = vld [vmem:[%s2 + $0x38] sm:$0xff]
  %v41 = vld [vmem:[%s0] sm:$0xff]
  %v42 = vld [vmem:[%s0 + $0x8] sm:$0xff]
  %v43 = vld [vmem:[%s0 + $0x10] sm:$0xff]
  %v44 = vld [vmem:[%s0 + $0x18] sm:$0xff]
  %v45 = vld [vmem:[%s0 + $0x20] sm:$0xff]
  %v46 = vld [vmem:[%s0 + $0x28] sm:$0xff]
  %v47 = vld [vmem:[%s0 + $0x30] sm:$0xff]
  %v48 = vld [vmem:[%s0 + $0x38] sm:$0xff]
  %v49 = vld [vmem:[%s0 + $0x40] sm:$0xff]
  %v50 = vld [vmem:[%s0 + $0x48] sm:$0xff]
  %v51 = vld [vmem:[%s0 + $0x50] sm:$0xff]
  %v52 = vld [vmem:[%s0 + $0x58] sm:$0xff]
  %v53 = vld [vmem:[%s0 + $0x60] sm:$0xff]
  %v54 = vld [vmem:[%s0 + $0x68] sm:$0xff]
  %v55 = vld [vmem:[%s0 + $0x70] sm:$0xff]
  %v56 = vld [vmem:[%s0 + $0x78] sm:$0xff]
  %v57 = vld [vmem:[%s0 + $0x80] sm:$0xff]
  %v58 = vld [vmem:[%s0 + $0x88] sm:$0xff]
  %v59 = vld [vmem:[%s0 + $0x90] sm:$0xff]
  %v60 = vld [vmem:[%s0 + $0x98] sm:$0xff]
  %v61 = vld [vmem:[%s0 + $0xa0] sm:$0xff]
  %v62 = vld [vmem:[%s0 + $0xa8] sm:$0xff]
  %v63 = vld [vmem:[%s0 + $0xb0] sm:$0xff]
  %v64 = vld [vmem:[%s0 + $0xb8] sm:$0xff]
  %v65 = vld [vmem:[%s0 + $0xc0] sm:$0xff]
  %v66 = vld [vmem:[%s0 + $0xc8] sm:$0xff]
  %v67 = vld [vmem:[%s0 + $0xd0] sm:$0xff]
  %v68 = vld [vmem:[%s0 + $0xd8] sm:$0xff]
  %v69 = vld [vmem:[%s3] sm:$0xff]
  %v70 = vld [vmem:[%s3 + $0x8] sm:$0xff]
  %v71 = vld [vmem:[%s3 + $0x10] sm:$0xff]
  %v72 = vld [vmem:[%s3 + $0x18] sm:$0xff]
  %v73 = vld [vmem:[%s3 + $0x20] sm:$0xff]
  %v74 = vld [vmem:[%s3 + $0x28] sm:$0xff]
  %v75 = vld [vmem:[%s3 + $0x30] sm:$0xff]
  %v76 = vld [vmem:[%s3 + $0x38] sm:$0xff]
  %78 = vset.pattern.permute.xlu0 0
  %79 = vperm.xlu0 %78, %v69
  %v80 = vpop.permute.xlu0 %79
  %83 = vset.pattern.permute.xlu0 0
  %84 = vperm.xlu0 %83, %v70
  %v85 = vpop.permute.xlu0 %84
  %88 = vset.pattern.permute.xlu0 0
  %89 = vperm.xlu0 %88, %v71
  %v90 = vpop.permute.xlu0 %89
  %93 = vset.pattern.permute.xlu0 0
  %94 = vperm.xlu0 %93, %v72
  %v95 = vpop.permute.xlu0 %94
  %98 = vset.pattern.permute.xlu0 0
  %99 = vperm.xlu0 %98, %v73
  %v100 = vpop.permute.xlu0 %99
  %103 = vset.pattern.permute.xlu0 0
  %104 = vperm.xlu0 %103, %v74
  %v105 = vpop.permute.xlu0 %104
  %108 = vset.pattern.permute.xlu0 0
  %109 = vperm.xlu0 %108, %v75
  %v110 = vpop.permute.xlu0 %109
  %113 = vset.pattern.permute.xlu0 0
  %114 = vperm.xlu0 %113, %v76
  %v115 = vpop.permute.xlu0 %114
  %v125 = vunpack.c.l.b16 %v33
  %v126 = vunpack.c.h.b16 %v33
  %v127 = vunpack.c.l.b16 %v34
  %v128 = vunpack.c.h.b16 %v34
  %v129 = vunpack.c.l.b16 %v35
  %v130 = vunpack.c.h.b16 %v35
  %v131 = vunpack.c.l.b16 %v36
  %v132 = vunpack.c.h.b16 %v36
  %v133 = vunpack.c.l.b16 %v37
  %v134 = vunpack.c.h.b16 %v37
  %v135 = vunpack.c.l.b16 %v38
  %v136 = vunpack.c.h.b16 %v38
  %v137 = vunpack.c.l.b16 %v39
  %v138 = vunpack.c.h.b16 %v39
  %v139 = vunpack.c.l.b16 %v40
  %v140 = vunpack.c.h.b16 %v40
  %v141 = vpack.c.b16 %v127, %v125
  %v142 = vpack.c.b16 %v128, %v126
  %v143 = vpack.c.b16 %v131, %v129
  %v144 = vpack.c.b16 %v132, %v130
  %v145 = vpack.c.b16 %v135, %v133
  %v146 = vpack.c.b16 %v136, %v134
  %v147 = vpack.c.b16 %v139, %v137
  %v148 = vpack.c.b16 %v140, %v138
  %v181 = vunpack.c.l.b16 %v41
  %v182 = vunpack.c.h.b16 %v41
  %v183 = vunpack.c.l.b16 %v42
  %v184 = vunpack.c.h.b16 %v42
  %v185 = vunpack.c.l.b16 %v43
  %v186 = vunpack.c.h.b16 %v43
  %v187 = vunpack.c.l.b16 %v44
  %v188 = vunpack.c.h.b16 %v44
  %v189 = vunpack.c.l.b16 %v45
  %v190 = vunpack.c.h.b16 %v45
  %v191 = vunpack.c.l.b16 %v46
  %v192 = vunpack.c.h.b16 %v46
  %v193 = vunpack.c.l.b16 %v47
  %v194 = vunpack.c.h.b16 %v47
  %v195 = vunpack.c.l.b16 %v48
  %v196 = vunpack.c.h.b16 %v48
  %v197 = vunpack.c.l.b16 %v49
  %v198 = vunpack.c.h.b16 %v49
  %v199 = vunpack.c.l.b16 %v50
  %v200 = vunpack.c.h.b16 %v50
  %v201 = vunpack.c.l.b16 %v51
  %v202 = vunpack.c.h.b16 %v51
  %v203 = vunpack.c.l.b16 %v52
  %v204 = vunpack.c.h.b16 %v52
  %v205 = vunpack.c.l.b16 %v53
  %v206 = vunpack.c.h.b16 %v53
  %v207 = vunpack.c.l.b16 %v54
  %v208 = vunpack.c.h.b16 %v54
  %v209 = vunpack.c.l.b16 %v55
  %v210 = vunpack.c.h.b16 %v55
  %v211 = vunpack.c.l.b16 %v56
  %v212 = vunpack.c.h.b16 %v56
  %v213 = vunpack.c.l.b16 %v57
  %v214 = vunpack.c.h.b16 %v57
  %v215 = vunpack.c.l.b16 %v58
  %v216 = vunpack.c.h.b16 %v58
  %v217 = vunpack.c.l.b16 %v59
  %v218 = vunpack.c.h.b16 %v59
  %v219 = vunpack.c.l.b16 %v60
  %v220 = vunpack.c.h.b16 %v60
  %v221 = vunpack.c.l.b16 %v61
  %v222 = vunpack.c.h.b16 %v61
  %v223 = vunpack.c.l.b16 %v62
  %v224 = vunpack.c.h.b16 %v62
  %v225 = vunpack.c.l.b16 %v63
  %v226 = vunpack.c.h.b16 %v63
  %v227 = vunpack.c.l.b16 %v64
  %v228 = vunpack.c.h.b16 %v64
  %v229 = vunpack.c.l.b16 %v65
  %v230 = vunpack.c.h.b16 %v65
  %v231 = vunpack.c.l.b16 %v66
  %v232 = vunpack.c.h.b16 %v66
  %v233 = vunpack.c.l.b16 %v67
  %v234 = vunpack.c.h.b16 %v67
  %v235 = vunpack.c.l.b16 %v68
  %v236 = vunpack.c.h.b16 %v68
  %v237 = vpack.c.b16 %v183, %v181
  %v238 = vpack.c.b16 %v184, %v182
  %v239 = vpack.c.b16 %v187, %v185
  %v240 = vpack.c.b16 %v188, %v186
  %v241 = vpack.c.b16 %v191, %v189
  %v242 = vpack.c.b16 %v192, %v190
  %v243 = vpack.c.b16 %v195, %v193
  %v244 = vpack.c.b16 %v196, %v194
  %v245 = vpack.c.b16 %v199, %v197
  %v246 = vpack.c.b16 %v200, %v198
  %v247 = vpack.c.b16 %v203, %v201
  %v248 = vpack.c.b16 %v204, %v202
  %v249 = vpack.c.b16 %v207, %v205
  %v250 = vpack.c.b16 %v208, %v206
  %v251 = vpack.c.b16 %v211, %v209
  %v252 = vpack.c.b16 %v212, %v210
  %v253 = vpack.c.b16 %v215, %v213
  %v254 = vpack.c.b16 %v216, %v214
  %v255 = vpack.c.b16 %v219, %v217
  %v256 = vpack.c.b16 %v220, %v218
  %v257 = vpack.c.b16 %v223, %v221
  %v258 = vpack.c.b16 %v224, %v222
  %v259 = vpack.c.b16 %v227, %v225
  %v260 = vpack.c.b16 %v228, %v226
  %v261 = vpack.c.b16 %v231, %v229
  %v262 = vpack.c.b16 %v232, %v230
  %v263 = vpack.c.b16 %v235, %v233
  %v264 = vpack.c.b16 %v236, %v234
  %vm293 = vcmask 785408
  %v295 = vsel %vm293, %v142, 0
  %v298 = vsel %vm293, %v144, 0
  %v301 = vsel %vm293, %v146, 0
  %v304 = vsel %vm293, %v148, 0
  %306 = vmatprep.subr.bf16.mxu0 %v238
  %307 = vmatpush1.bf16.msra.mxu0 %v237
  %308 = vmatprep.subr.bf16.mxu0 %v240
  %309 = vmatpush1.bf16.msra.mxu0 %v239
  %310 = vmatprep.subr.bf16.mxu0 %v242
  %311 = vmatpush1.bf16.msra.mxu0 %v241
  %312 = vmatprep.subr.bf16.mxu0 %v244
  %313 = vmatpush1.bf16.msra.mxu0 %v243
  %314 = vmatprep.subr.bf16.mxu0 %v246
  %315 = vmatpush1.bf16.msra.mxu0 %v245
  %316 = vmatprep.subr.bf16.mxu0 %v248
  %317 = vmatpush1.bf16.msra.mxu0 %v247
  %318 = vmatprep.subr.bf16.mxu0 %v250
  %319 = vmatpush1.bf16.msra.mxu0 %v249
  %320 = vmatprep.subr.bf16.mxu0 %v252
  %321 = vmatpush1.bf16.msra.mxu0 %v251
  %322 = vmatprep.subr.bf16.mxu0 %v254
  %323 = vmatpush1.bf16.msra.mxu0 %v253
  %324 = vmatprep.subr.bf16.mxu0 %v256
  %325 = vmatpush1.bf16.msra.mxu0 %v255
  %326 = vmatprep.subr.bf16.mxu0 %v258
  %327 = vmatpush1.bf16.msra.mxu0 %v257
  %328 = vmatprep.subr.bf16.mxu0 %v260
  %329 = vmatpush1.bf16.msra.mxu0 %v259
  %330 = vmatprep.subr.bf16.mxu0 %v262
  %331 = vmatpush1.bf16.msra.mxu0 %v261
  %332 = vmatprep.subr.bf16.mxu0 %v264
  %333 = vmatpush1.bf16.msra.mxu0 %v263
  %334 = vmatprep.subr.bf16.mxu0 0
  %335 = vmatpush1.bf16.msra.mxu0 0
  %336 = vmatprep.subr.bf16.mxu0 0
  %337 = vmatpush1.bf16.msra.mxu0 0
  %338 = vmatprep.mubr.bf16.mxu0 %v295
  %339 = vmatmul.mubr.bf16.gmra.mrb[0].mxu0 %v141
  %v340 = vpop.f32.mrb[0].mxu0
  %v341 = vadd.f32 %v80, %v340
  %v342 = vpop.f32.mrb[0].mxu0
  %v343 = vadd.f32 %v80, %v342
  %v344 = vpop.f32.mrb[0].mxu0
  %v345 = vadd.f32 %v85, %v344
  %v346 = vpop.f32.mrb[0].mxu0
  %v347 = vadd.f32 %v85, %v346
  %348 = vmatprep.mubr.bf16.mxu0 %v298
  %349 = vmatmul.mubr.bf16.gmra.mrb[0].mxu0 %v143
  %v350 = vpop.f32.mrb[0].mxu0
  %v351 = vadd.f32 %v90, %v350
  %v352 = vpop.f32.mrb[0].mxu0
  %v353 = vadd.f32 %v90, %v352
  %v354 = vpop.f32.mrb[0].mxu0
  %v355 = vadd.f32 %v95, %v354
  %v356 = vpop.f32.mrb[0].mxu0
  %v357 = vadd.f32 %v95, %v356
  %358 = vmatprep.mubr.bf16.mxu0 %v301
  %359 = vmatmul.mubr.bf16.gmra.mrb[0].mxu0 %v145
  %v360 = vpop.f32.mrb[0].mxu0
  %v361 = vadd.f32 %v100, %v360
  %v362 = vpop.f32.mrb[0].mxu0
  %v363 = vadd.f32 %v100, %v362
  %v364 = vpop.f32.mrb[0].mxu0
  %v365 = vadd.f32 %v105, %v364
  %v366 = vpop.f32.mrb[0].mxu0
  %v367 = vadd.f32 %v105, %v366
  %368 = vmatprep.mubr.bf16.mxu0 %v304
  %369 = vmatmul.mubr.bf16.gmra.mrb[0].mxu0 %v147
  %v370 = vpop.f32.mrb[0].mxu0
  %v371 = vadd.f32 %v110, %v370
  %v372 = vpop.f32.mrb[0].mxu0
  %v373 = vadd.f32 %v110, %v372
  %v374 = vpop.f32.mrb[0].mxu0
  %v375 = vadd.f32 %v115, %v374
  %v376 = vpop.f32.mrb[0].mxu0
  %v377 = vadd.f32 %v115, %v376
  %378 = vdwg.mxu0
  %v379 = vld [vmem:[%s1] sm:$0x3]
  %v381 = vlaneseq
  %v382 = vshrl.u32 %v381, 7
  %v383 = vsub.s32 0, %v382
  %v384 = vrot.slane %v379, %v383
  %v385 = vlaneseq
  %v386 = vshrl.u32 %v385, 7
  %v387 = vsub.s32 1, %v386
  %v388 = vrot.slane %v379, %v387
  %v391 = vadd.f32 %v361, %v384
  %v392 = vadd.f32 %v363, %v388
  %v393 = vadd.f32 %v365, %v384
  %v394 = vadd.f32 %v367, %v388
  %v395 = vadd.f32 %v371, %v384
  %v396 = vadd.f32 %v373, %v388
  %v397 = vadd.f32 %v375, %v384
  %v398 = vadd.f32 %v377, %v388
  %v399 = vmax.f32 %v391, %v392
  %400 = vmax.xlane.f32.xlu0 %v399
  %v401 = vpop.xlane.xlu0 %400
  %v402 = vmax.f32 %v393, %v394
  %403 = vmax.xlane.f32.xlu0 %v402
  %v404 = vpop.xlane.xlu0 %403
  %v405 = vmax.f32 %v395, %v396
  %406 = vmax.xlane.f32.xlu0 %v405
  %v407 = vpop.xlane.xlu0 %406
  %v408 = vmax.f32 %v397, %v398
  %409 = vmax.xlane.f32.xlu0 %v408
  %v410 = vpop.xlane.xlu0 %409
  %v411 = vsub.f32 %v391, %v401
  %v412 = vsub.f32 %v392, %v401
  %v413 = vsub.f32 %v393, %v404
  %v414 = vsub.f32 %v394, %v404
  %v415 = vsub.f32 %v395, %v407
  %v416 = vsub.f32 %v396, %v407
  %v417 = vsub.f32 %v397, %v410
  %v418 = vsub.f32 %v398, %v410
  %v419 = vmul.f32 %v411, 1.442695
  %v420 = vpow.pop %v419
  %v421 = vmul.f32 %v412, 1.442695
  %v422 = vpow.pop %v421
  %v423 = vmul.f32 %v413, 1.442695
  %v424 = vpow.pop %v423
  %v425 = vmul.f32 %v414, 1.442695
  %v426 = vpow.pop %v425
  %v427 = vmul.f32 %v415, 1.442695
  %v428 = vpow.pop %v427
  %v429 = vmul.f32 %v416, 1.442695
  %v430 = vpow.pop %v429
  %v431 = vmul.f32 %v417, 1.442695
  %v432 = vpow.pop %v431
  %v433 = vmul.f32 %v418, 1.442695
  %v434 = vpow.pop %v433
  %v435 = vmul.f32 %v341, %v420
  %v436 = vmul.f32 %v343, %v422
  %v437 = vmul.f32 %v345, %v424
  %v438 = vmul.f32 %v347, %v426
  %v439 = vmul.f32 %v351, %v428
  %v440 = vmul.f32 %v353, %v430
  %v441 = vmul.f32 %v355, %v432
  %v442 = vmul.f32 %v357, %v434
  %v443 = vld [vmem:[%s4] sm:$0xff]
  %v444 = vld [vmem:[%s4 + $0x8] sm:$0xff]
  %v445 = vld [vmem:[%s4 + $0x10] sm:$0xff]
  %v446 = vld [vmem:[%s4 + $0x18] sm:$0xff]
  %v447 = vld [vmem:[%s4 + $0x20] sm:$0xff]
  %v448 = vld [vmem:[%s4 + $0x28] sm:$0xff]
  %v449 = vld [vmem:[%s4 + $0x30] sm:$0xff]
  %v450 = vld [vmem:[%s4 + $0x38] sm:$0xff]
  %v451 = vld [vmem:[%s4 + $0x40] sm:$0xff]
  %v452 = vld [vmem:[%s4 + $0x48] sm:$0xff]
  %v453 = vld [vmem:[%s4 + $0x50] sm:$0xff]
  %v454 = vld [vmem:[%s4 + $0x58] sm:$0xff]
  %v455 = vld [vmem:[%s4 + $0x60] sm:$0xff]
  %v456 = vld [vmem:[%s4 + $0x68] sm:$0xff]
  %v457 = vld [vmem:[%s4 + $0x70] sm:$0xff]
  %v458 = vld [vmem:[%s4 + $0x78] sm:$0xff]
  %v459 = vld [vmem:[%s4 + $0x80] sm:$0xff]
  %v460 = vld [vmem:[%s4 + $0x88] sm:$0xff]
  %v461 = vld [vmem:[%s4 + $0x90] sm:$0xff]
  %v462 = vld [vmem:[%s4 + $0x98] sm:$0xff]
  %v463 = vld [vmem:[%s4 + $0xa0] sm:$0xff]
  %v464 = vld [vmem:[%s4 + $0xa8] sm:$0xff]
  %v465 = vld [vmem:[%s4 + $0xb0] sm:$0xff]
  %v466 = vld [vmem:[%s4 + $0xb8] sm:$0xff]
  %v467 = vld [vmem:[%s4 + $0xc0] sm:$0xff]
  %v468 = vld [vmem:[%s4 + $0xc8] sm:$0xff]
  %v469 = vld [vmem:[%s4 + $0xd0] sm:$0xff]
  %v470 = vld [vmem:[%s4 + $0xd8] sm:$0xff]
  %v471 = vld [vmem:[%s4 + $0xe0] sm:$0xff]
  %v472 = vld [vmem:[%s4 + $0xe8] sm:$0xff]
  %v473 = vld [vmem:[%s4 + $0xf0] sm:$0xff]
  %v474 = vld [vmem:[%s4 + $0xf8] sm:$0xff]
  %475 = vmatprep.subr.mxu0 0.0
  %476 = vmatpush1.msra.mxu0 %v443
  %477 = vmatprep.subr.mxu0 0.0
  %478 = vmatpush1.msra.mxu0 %v444
  %479 = vmatprep.subr.mxu0 0.0
  %480 = vmatpush1.msra.mxu0 %v445
  %481 = vmatprep.subr.mxu0 0.0
  %482 = vmatpush1.msra.mxu0 %v446
  %483 = vmatprep.subr.mxu0 0.0
  %484 = vmatpush1.msra.mxu0 %v447
  %485 = vmatprep.subr.mxu0 0.0
  %486 = vmatpush1.msra.mxu0 %v448
  %487 = vmatprep.subr.mxu0 0.0
  %488 = vmatpush1.msra.mxu0 %v449
  %489 = vmatprep.subr.mxu0 0.0
  %490 = vmatpush1.msra.mxu0 %v450
  %491 = vmatprep.subr.mxu0 0.0
  %492 = vmatpush1.msra.mxu0 %v451
  %493 = vmatprep.subr.mxu0 0.0
  %494 = vmatpush1.msra.mxu0 %v452
  %495 = vmatprep.subr.mxu0 0.0
  %496 = vmatpush1.msra.mxu0 %v453
  %497 = vmatprep.subr.mxu0 0.0
  %498 = vmatpush1.msra.mxu0 %v454
  %499 = vmatprep.subr.mxu0 0.0
  %500 = vmatpush1.msra.mxu0 %v455
  %501 = vmatprep.subr.mxu0 0.0
  %502 = vmatpush1.msra.mxu0 %v456
  %503 = vmatprep.subr.mxu0 0.0
  %504 = vmatpush1.msra.mxu0 %v457
  %505 = vmatprep.subr.mxu0 0.0
  %506 = vmatpush1.msra.mxu0 %v458
  %507 = vmatprep.subr.mxu0 0.0
  %508 = vmatpush1.msra.mxu0 %v459
  %509 = vmatprep.subr.mxu0 0.0
  %510 = vmatpush1.msra.mxu0 %v460
  %511 = vmatprep.subr.mxu0 0.0
  %512 = vmatpush1.msra.mxu0 %v461
  %513 = vmatprep.subr.mxu0 0.0
  %514 = vmatpush1.msra.mxu0 %v462
  %515 = vmatprep.subr.mxu0 0.0
  %516 = vmatpush1.msra.mxu0 %v463
  %517 = vmatprep.subr.mxu0 0.0
  %518 = vmatpush1.msra.mxu0 %v464
  %519 = vmatprep.subr.mxu0 0.0
  %520 = vmatpush1.msra.mxu0 %v465
  %521 = vmatprep.subr.mxu0 0.0
  %522 = vmatpush1.msra.mxu0 %v466
  %523 = vmatprep.subr.mxu0 0.0
  %524 = vmatpush1.msra.mxu0 %v467
  %525 = vmatprep.subr.mxu0 0.0
  %526 = vmatpush1.msra.mxu0 %v468
  %527 = vmatprep.subr.mxu0 0.0
  %528 = vmatpush1.msra.mxu0 %v469
  %529 = vmatprep.subr.mxu0 0.0
  %530 = vmatpush1.msra.mxu0 %v470
  %531 = vmatprep.subr.mxu0 0.0
  %532 = vmatpush1.msra.mxu0 %v471
  %533 = vmatprep.subr.mxu0 0.0
  %534 = vmatpush1.msra.mxu0 %v472
  %535 = vmatprep.subr.mxu0 0.0
  %536 = vmatpush1.msra.mxu0 %v473
  %537 = vmatprep.subr.mxu0 0.0
  %538 = vmatpush1.msra.mxu0 %v474
  %539 = vmatprep.mubr.f32.mxu0 %v422
  %540 = vmatmul.mubr.f32.gmra.mrb[0].mxu0 %v420
  %v541 = vpop.f32.mrb[0].mxu0
  %v542 = vadd.f32 0.0, %v541
  %v543 = vpop.f32.mrb[0].mxu0
  %544 = vmatprep.mubr.f32.mxu0 %v426
  %545 = vmatmul.mubr.f32.gmra.mrb[0].mxu0 %v424
  %v546 = vpop.f32.mrb[0].mxu0
  %v547 = vadd.f32 0.0, %v546
  %v548 = vpop.f32.mrb[0].mxu0
  %549 = vmatprep.mubr.f32.mxu0 %v430
  %550 = vmatmul.mubr.f32.gmra.mrb[0].mxu0 %v428
  %v551 = vpop.f32.mrb[0].mxu0
  %v552 = vadd.f32 0.0, %v551
  %v553 = vpop.f32.mrb[0].mxu0
  %554 = vmatprep.mubr.f32.mxu0 %v434
  %555 = vmatmul.mubr.f32.gmra.mrb[0].mxu0 %v432
  %v556 = vpop.f32.mrb[0].mxu0
  %v557 = vadd.f32 0.0, %v556
  %v558 = vpop.f32.mrb[0].mxu0
  %559 = vmatprep.mubr.f32.mxu0 %v436
  %560 = vmatmul.mubr.f32.gmra.mrb[0].mxu0 %v435
  %v561 = vpop.f32.mrb[0].mxu0
  %v562 = vadd.f32 0.0, %v561
  %v563 = vpop.f32.mrb[0].mxu0
  %564 = vmatprep.mubr.f32.mxu0 %v438
  %565 = vmatmul.mubr.f32.gmra.mrb[0].mxu0 %v437
  %v566 = vpop.f32.mrb[0].mxu0
  %v567 = vadd.f32 0.0, %v566
  %v568 = vpop.f32.mrb[0].mxu0
  %569 = vmatprep.mubr.f32.mxu0 %v440
  %570 = vmatmul.mubr.f32.gmra.mrb[0].mxu0 %v439
  %v571 = vpop.f32.mrb[0].mxu0
  %v572 = vadd.f32 0.0, %v571
  %v573 = vpop.f32.mrb[0].mxu0
  %574 = vmatprep.mubr.f32.mxu0 %v442
  %575 = vmatmul.mubr.f32.gmra.mrb[0].mxu0 %v441
  %v576 = vpop.f32.mrb[0].mxu0
  %v577 = vadd.f32 0.0, %v576
  %v578 = vpop.f32.mrb[0].mxu0
  %579 = vdwg.mxu0
  %v580 = vadd.f32 %v542, 1e-09
  %v581 = vadd.f32 %v547, 1e-09
  %v582 = vadd.f32 %v552, 1e-09
  %v583 = vadd.f32 %v557, 1e-09
  %v584 = vrcp.pop %v580
  %v585 = vrcp.pop %v581
  %v586 = vrcp.pop %v582
  %v587 = vrcp.pop %v583
  %v588 = vmul.f32 %v562, %v584
  %v589 = vmul.f32 %v567, %v585
  %v590 = vmul.f32 %v572, %v586
  %v591 = vmul.f32 %v577, %v587
  %v592 = vld [vmem:[%s5] sm:$0xff]
  %v593 = vld [vmem:[%s5 + $0x8] sm:$0xff]
  %v594 = vld [vmem:[%s5 + $0x10] sm:$0xff]
  %v595 = vld [vmem:[%s5 + $0x18] sm:$0xff]
  %v596 = vld [vmem:[%s6] sm:$0xff]
  %v597 = vld [vmem:[%s6 + $0x8] sm:$0xff]
  %v598 = vld [vmem:[%s6 + $0x10] sm:$0xff]
  %v599 = vld [vmem:[%s6 + $0x18] sm:$0xff]
  %601 = vset.pattern.permute.xlu0 0
  %602 = vperm.xlu0 %601, %v596
  %v603 = vpop.permute.xlu0 %602
  %606 = vset.pattern.permute.xlu0 0
  %607 = vperm.xlu0 %606, %v597
  %v608 = vpop.permute.xlu0 %607
  %611 = vset.pattern.permute.xlu0 0
  %612 = vperm.xlu0 %611, %v598
  %v613 = vpop.permute.xlu0 %612
  %616 = vset.pattern.permute.xlu0 0
  %617 = vperm.xlu0 %616, %v599
  %v618 = vpop.permute.xlu0 %617
  %vm620 = vcmask 261120
  %v622 = vsel %vm620, %v592, 0
  %v625 = vsel %vm620, %v593, 0
  %v628 = vsel %vm620, %v594, 0
  %v631 = vsel %vm620, %v595, 0
  %633 = vmatprep.subr.mxu0 0.0
  %634 = vmatpush1.msra.mxu0 %v588
  %635 = vmatprep.subr.mxu0 0.0
  %636 = vmatpush1.msra.mxu0 %v589
  %637 = vmatprep.subr.mxu0 0.0
  %638 = vmatpush1.msra.mxu0 %v590
  %639 = vmatprep.subr.mxu0 0.0
  %640 = vmatpush1.msra.mxu0 %v591
  %641 = vmatprep.subr.mxu0 0.0
  %642 = vmatpush1.msra.mxu0 0.0
  %643 = vmatprep.subr.mxu0 0.0
  %644 = vmatpush1.msra.mxu0 0.0
  %645 = vmatprep.subr.mxu0 0.0
  %646 = vmatpush1.msra.mxu0 0.0
  %647 = vmatprep.subr.mxu0 0.0
  %648 = vmatpush1.msra.mxu0 0.0
  %649 = vmatprep.subr.mxu0 0.0
  %650 = vmatpush1.msra.mxu0 0.0
  %651 = vmatprep.subr.mxu0 0.0
  %652 = vmatpush1.msra.mxu0 0.0
  %653 = vmatprep.subr.mxu0 0.0
  %654 = vmatpush1.msra.mxu0 0.0
  %655 = vmatprep.subr.mxu0 0.0
  %656 = vmatpush1.msra.mxu0 0.0
  %657 = vmatprep.subr.mxu0 0.0
  %658 = vmatpush1.msra.mxu0 0.0
  %659 = vmatprep.subr.mxu0 0.0
  %660 = vmatpush1.msra.mxu0 0.0
  %661 = vmatprep.subr.mxu0 0.0
  %662 = vmatpush1.msra.mxu0 0.0
  %663 = vmatprep.subr.mxu0 0.0
  %664 = vmatpush1.msra.mxu0 0.0
  %665 = vmatprep.subr.mxu0 0.0
  %666 = vmatpush1.msra.mxu0 0.0
  %667 = vmatprep.subr.mxu0 0.0
  %668 = vmatpush1.msra.mxu0 0.0
  %669 = vmatprep.subr.mxu0 0.0
  %670 = vmatpush1.msra.mxu0 0.0
  %671 = vmatprep.subr.mxu0 0.0
  %672 = vmatpush1.msra.mxu0 0.0
  %673 = vmatprep.subr.mxu0 0.0
  %674 = vmatpush1.msra.mxu0 0.0
  %675 = vmatprep.subr.mxu0 0.0
  %676 = vmatpush1.msra.mxu0 0.0
  %677 = vmatprep.subr.mxu0 0.0
  %678 = vmatpush1.msra.mxu0 0.0
  %679 = vmatprep.subr.mxu0 0.0
  %680 = vmatpush1.msra.mxu0 0.0
  %681 = vmatprep.subr.mxu0 0.0
  %682 = vmatpush1.msra.mxu0 0.0
  %683 = vmatprep.subr.mxu0 0.0
  %684 = vmatpush1.msra.mxu0 0.0
  %685 = vmatprep.subr.mxu0 0.0
  %686 = vmatpush1.msra.mxu0 0.0
  %687 = vmatprep.subr.mxu0 0.0
  %688 = vmatpush1.msra.mxu0 0.0
  %689 = vmatprep.subr.mxu0 0.0
  %690 = vmatpush1.msra.mxu0 0.0
  %691 = vmatprep.subr.mxu0 0.0
  %692 = vmatpush1.msra.mxu0 0.0
  %693 = vmatprep.subr.mxu0 0.0
  %694 = vmatpush1.msra.mxu0 0.0
  %695 = vmatprep.subr.mxu0 0.0
  %696 = vmatpush1.msra.mxu0 0.0
  %697 = vmatprep.mubr.f32.mxu0 0.0
  %698 = vmatmul.mubr.f32.gmra.mrb[0].mxu0 %v622
  %v699 = vpop.f32.mrb[0].mxu0
  %v700 = vadd.f32 %v603, %v699
  %v701 = vpop.f32.mrb[0].mxu0
  %702 = vmatprep.mubr.f32.mxu0 0.0
  %703 = vmatmul.mubr.f32.gmra.mrb[0].mxu0 %v625
  %v704 = vpop.f32.mrb[0].mxu0
  %v705 = vadd.f32 %v608, %v704
  %v706 = vpop.f32.mrb[0].mxu0
  %707 = vmatprep.mubr.f32.mxu0 0.0
  %708 = vmatmul.mubr.f32.gmra.mrb[0].mxu0 %v628
  %v709 = vpop.f32.mrb[0].mxu0
  %v710 = vadd.f32 %v613, %v709
  %v711 = vpop.f32.mrb[0].mxu0
  %712 = vmatprep.mubr.f32.mxu0 0.0
  %713 = vmatmul.mubr.f32.gmra.mrb[0].mxu0 %v631
  %v714 = vpop.f32.mrb[0].mxu0
  %v715 = vadd.f32 %v618, %v714
  %v716 = vpop.f32.mrb[0].mxu0
  %717 = vdwg.mxu0
  %v718 = vmax.f32 %v700, 0.0
  %v719 = vmax.f32 %v705, 0.0
  %v720 = vmax.f32 %v710, 0.0
  %v721 = vmax.f32 %v715, 0.0
  %v722 = vld [vmem:[%s7] sm:$0xff]
  %v723 = vld [vmem:[%s7 + $0x8] sm:$0x7]
  %v724 = vld [vmem:[%s8] sm:$0xff]
  %v725 = vld [vmem:[%s8 + $0x8] sm:$0x7]
  %727 = vset.pattern.permute.xlu0 0
  %728 = vperm.xlu0 %727, %v724
  %v729 = vpop.permute.xlu0 %728
  %732 = vset.pattern.permute.xlu0 0
  %733 = vperm.xlu0 %732, %v725
  %v734 = vpop.permute.xlu0 %733
  %v737 = vsel %vm620, %v722, 0
  %v740 = vsel %vm620, %v723, 0
  %742 = vmatprep.subr.mxu0 0.0
  %743 = vmatpush1.msra.mxu0 %v718
  %744 = vmatprep.subr.mxu0 0.0
  %745 = vmatpush1.msra.mxu0 %v719
  %746 = vmatprep.subr.mxu0 0.0
  %747 = vmatpush1.msra.mxu0 %v720
  %748 = vmatprep.subr.mxu0 0.0
  %749 = vmatpush1.msra.mxu0 %v721
  %750 = vmatprep.subr.mxu0 0.0
  %751 = vmatpush1.msra.mxu0 0.0
  %752 = vmatprep.subr.mxu0 0.0
  %753 = vmatpush1.msra.mxu0 0.0
  %754 = vmatprep.subr.mxu0 0.0
  %755 = vmatpush1.msra.mxu0 0.0
  %756 = vmatprep.subr.mxu0 0.0
  %757 = vmatpush1.msra.mxu0 0.0
  %758 = vmatprep.subr.mxu0 0.0
  %759 = vmatpush1.msra.mxu0 0.0
  %760 = vmatprep.subr.mxu0 0.0
  %761 = vmatpush1.msra.mxu0 0.0
  %762 = vmatprep.subr.mxu0 0.0
  %763 = vmatpush1.msra.mxu0 0.0
  %764 = vmatprep.subr.mxu0 0.0
  %765 = vmatpush1.msra.mxu0 0.0
  %766 = vmatprep.subr.mxu0 0.0
  %767 = vmatpush1.msra.mxu0 0.0
  %768 = vmatprep.subr.mxu0 0.0
  %769 = vmatpush1.msra.mxu0 0.0
  %770 = vmatprep.subr.mxu0 0.0
  %771 = vmatpush1.msra.mxu0 0.0
  %772 = vmatprep.subr.mxu0 0.0
  %773 = vmatpush1.msra.mxu0 0.0
  %774 = vmatprep.subr.mxu0 0.0
  %775 = vmatpush1.msra.mxu0 0.0
  %776 = vmatprep.subr.mxu0 0.0
  %777 = vmatpush1.msra.mxu0 0.0
  %778 = vmatprep.subr.mxu0 0.0
  %779 = vmatpush1.msra.mxu0 0.0
  %780 = vmatprep.subr.mxu0 0.0
  %781 = vmatpush1.msra.mxu0 0.0
  %782 = vmatprep.subr.mxu0 0.0
  %783 = vmatpush1.msra.mxu0 0.0
  %784 = vmatprep.subr.mxu0 0.0
  %785 = vmatpush1.msra.mxu0 0.0
  %786 = vmatprep.subr.mxu0 0.0
  %787 = vmatpush1.msra.mxu0 0.0
  %788 = vmatprep.subr.mxu0 0.0
  %789 = vmatpush1.msra.mxu0 0.0
  %790 = vmatprep.subr.mxu0 0.0
  %791 = vmatpush1.msra.mxu0 0.0
  %792 = vmatprep.subr.mxu0 0.0
  %793 = vmatpush1.msra.mxu0 0.0
  %794 = vmatprep.subr.mxu0 0.0
  %795 = vmatpush1.msra.mxu0 0.0
  %796 = vmatprep.subr.mxu0 0.0
  %797 = vmatpush1.msra.mxu0 0.0
  %798 = vmatprep.subr.mxu0 0.0
  %799 = vmatpush1.msra.mxu0 0.0
  %800 = vmatprep.subr.mxu0 0.0
  %801 = vmatpush1.msra.mxu0 0.0
  %802 = vmatprep.subr.mxu0 0.0
  %803 = vmatpush1.msra.mxu0 0.0
  %804 = vmatprep.subr.mxu0 0.0
  %805 = vmatpush1.msra.mxu0 0.0
  %806 = vmatprep.mubr.f32.mxu0 0.0
  %807 = vmatmul.mubr.f32.gmra.mrb[0].mxu0 %v737
  %v808 = vpop.f32.mrb[0].mxu0
  %v809 = vadd.f32 %v729, %v808
  %v810 = vpop.f32.mrb[0].mxu0
  %811 = vmatprep.mubr.f32.mxu0 0.0
  %812 = vmatmul.mubr.f32.gmra.mrb[0].mxu0 %v740
  %v813 = vpop.f32.mrb[0].mxu0
  %v814 = vadd.f32 %v734, %v813
  %v815 = vpop.f32.mrb[0].mxu0
  %816 = vdwg.mxu0
  %vm817 = vcmask 130048
  %818 = vst.msk [vmem:[%s9] sm:$0xff] %vm817, %v809
  %vm819 = vcmask 124928
  %820 = vst.msk [vmem:[%s9 + $0x8] sm:$0x7] %vm819, %v814
  // Predicated region
  $region38: #{tpu_custom_call.1} parent=0 // pred_check
    _
  $region39: #{tpu_custom_call.1} parent=0 // pred_check_branch
    %822 = sbr.rel (0) target = $region41
  $region40: #{tpu_custom_call.1} parent=0 // pred_region
    _
  $region41: #{tpu_custom_call.1} parent=0 // pred_fallthru
    _
  // Predicated region
  $region42: #{tpu_custom_call.1} parent=0 // pred_check
    _
  $region43: #{tpu_custom_call.1} parent=0 // pred_check_branch
    %824 = sbr.rel (0) target = $region45
  $region44: #{tpu_custom_call.1} parent=0 // pred_region
    _
  $region45: #{tpu_custom_call.1} parent=0 // pred_fallthru
    _

</llo_original>
